<compile_context>
chip_gen: v7x
topology: tpu7x:2x2x1
jax: 0.10.0
libtpu: 0.0.40
codegen_flags: <defaults>
</compile_context>

<pallas_src>
import functools

import jax
import jax.numpy as jnp
from jax import lax
from jax.experimental import pallas as pl
from jax.experimental.pallas import tpu as pltpu

# ---- module hyper-parameters (mirror SeparableConv1d.__init__ args) ----------
IN_CHANNELS = 4
OUT_CHANNELS = 8
KERNEL_SIZE = 3
STRIDE = 1          # only stride=1 implemented
PADDING = 1         # length-preserving: 2*padding == dilation*(kernel_size-1)
DILATION = 1
USE_BIAS = True

LANE = 128


def _sepconv1d_kernel(wd_ref, wpb_ref, b_ref, x_ref, o_ref,
                      *, k, padding, dilation, length):
    """One batch tile per grid step, NCL layout, L on the lane axis.

    wd_ref : VMEM (C_in, K)          depthwise weights
    wpb_ref: VMEM (TB, C_out, C_in)  pointwise weights (broadcast over the tile)
    b_ref  : VMEM (C_out, 1)         pointwise bias
    x_ref  : VMEM (TB, C_in, Lp)
    o_ref  : VMEM (TB, C_out, Lp)
    """
    x = x_ref[...].astype(jnp.float32)                      # (TB, C_in, Lp)
    wd = wd_ref[...].astype(jnp.float32)                    # (C_in, K)
    lp = x.shape[-1]
    lane = lax.broadcasted_iota(jnp.int32, (1, 1, lp), 2)   # hoisted once

    # Depthwise FIR: K dense VPU FMAs on the full block.  Each off-center tap
    # is a static lane rotation (XLU) plus one single-sided boundary mask
    # implementing the 'zeros' padding.
    y = jnp.zeros(x.shape, jnp.float32)
    for t in range(k):
        off = t * dilation - padding                        # tap t reads x[l + off]
        if off == 0:
            xs = x
        else:
            xs = pltpu.roll(x, shift=(-off) % lp, axis=2)
            mask = (lane >= -off) if off < 0 else (lane < length - off)
            xs = jnp.where(mask, xs, 0.0)
        y = y + xs * wd[:, t:t + 1][None]                   # (1, C_in, 1) bcast

    # Pointwise 1x1 conv on the MXU: one (C_out, C_in) x (C_in, Lp) matmul per
    # batch element, landing directly as a dense (TB, C_out, Lp) tile.
    out = jnp.einsum('bof,bfl->bol', wpb_ref[...], y,
                     preferred_element_type=jnp.float32)
    out = out + b_ref[...][None]                            # (1, C_out, 1) bcast
    o_ref[...] = out.astype(o_ref.dtype)                    # single dense store


def _pick_batch_tile(n, c_in, lp, itemsize):
    """x block ~0.5 MiB (review target 0.5-2 MiB); keep >= 2 grid steps."""
    target = 1 << 19
    tb = max(1, min(n, target // max(1, c_in * lp * itemsize)))
    if n > 1 and tb >= n:
        tb = (n + 1) // 2          # v7x has 2 TensorCores on the parallel axis
    return tb


def separable_conv1d(x_ncl, w_depth, w_point, bias,
                     *, stride=STRIDE, padding=PADDING, dilation=DILATION):
    """x_ncl: (N, C_in, L); w_depth: (C_in, 1, K); w_point: (C_out, C_in, 1);
    bias: (C_out,).  Returns (N, C_out, L) (length-preserving config)."""
    n, c_in, l = x_ncl.shape
    c_out = w_point.shape[0]
    k = w_depth.shape[-1]

    # TODO(synk): only the length-preserving stride-1 'zeros' config is
    # implemented (matches the module docstring's (N, C_out, L) contract).
    assert stride == 1
    assert 2 * padding == dilation * (k - 1)
    l_out = (l + 2 * padding - dilation * (k - 1) - 1) // stride + 1
    assert l_out == l

    # Lane-pad L and batch-pad N (zero padding is benign: in-kernel masks use
    # the true L and padded rows/columns are sliced off below).
    lp = max(LANE, ((l + LANE - 1) // LANE) * LANE)
    tb = _pick_batch_tile(n, c_in, lp, x_ncl.dtype.itemsize)
    n_pad = ((n + tb - 1) // tb) * tb
    if (lp != l) or (n_pad != n):
        x_ncl = jnp.pad(x_ncl, ((0, n_pad - n), (0, 0), (0, lp - l)))

    wd = w_depth[:, 0, :].astype(jnp.float32)                 # (C_in, K)
    wp = w_point[:, :, 0].astype(jnp.float32)                 # (C_out, C_in)
    wp_b = jnp.broadcast_to(wp[None], (tb, c_out, c_in))      # grid-invariant
    b2 = bias.reshape(c_out, 1).astype(jnp.float32)           # (C_out, 1)

    kernel = functools.partial(_sepconv1d_kernel, k=k, padding=padding,
                               dilation=dilation, length=l)

    # Working-set estimate (sublane/lane-padded, in+out double-buffered plus
    # the grid-invariant weights): a few MiB even at TB=256/f32 -- well under
    # every generation's VMEM, including v7x's 64 MiB.
    r8 = lambda v: -(-v // 8) * 8
    blk = 4 * tb * (r8(c_in) + r8(c_out)) * lp
    wpb_blk = 4 * tb * r8(c_out) * LANE
    vmem_limit = int(min(48 << 20, max(16 << 20, 4 * blk + 2 * wpb_blk)))

    out = pl.pallas_call(
        kernel,
        out_shape=jax.ShapeDtypeStruct((n_pad, c_out, lp), x_ncl.dtype),
        grid=(n_pad // tb,),
        in_specs=[
            pl.BlockSpec((c_in, k), lambda i: (0, 0)),             # depthwise w
            pl.BlockSpec((tb, c_out, c_in), lambda i: (0, 0, 0)),  # pointwise w
            pl.BlockSpec((c_out, 1), lambda i: (0, 0)),            # bias
            pl.BlockSpec((tb, c_in, lp), lambda i: (i, 0, 0)),     # x (NCL)
        ],
        out_specs=pl.BlockSpec((tb, c_out, lp), lambda i: (i, 0, 0)),
        compiler_params=pltpu.CompilerParams(
            dimension_semantics=("parallel",),
            vmem_limit_bytes=vmem_limit),
    )(wd, wp_b, b2, x_ncl)

    return out[:n, :, :l]


def _reference(x_ncl, w_depth, w_point, bias,
               *, stride=STRIDE, padding=PADDING, dilation=DILATION):
    """Plain-JAX reference matching PyTorch semantics."""
    n, c_in, l = x_ncl.shape
    k = w_depth.shape[-1]
    l_out = (l + 2 * padding - dilation * (k - 1) - 1) // stride + 1
    xp = jnp.pad(x_ncl, ((0, 0), (0, 0), (padding, padding)))
    y = jnp.zeros((n, c_in, l_out), jnp.float32)
    for tap in range(k):
        s = tap * dilation
        xs = xp[:, :, s:s + (l_out - 1) * stride + 1:stride].astype(jnp.float32)
        y = y + xs * w_depth[:, 0, tap].astype(jnp.float32)[None, :, None]
    out = jnp.einsum('ncl,oc->nol', y, w_point[:, :, 0].astype(jnp.float32))
    out = out + bias.astype(jnp.float32)[None, :, None]
    return out.astype(x_ncl.dtype)


if __name__ == "__main__":
    key = jax.random.PRNGKey(0)
    k_x, k_wd, k_wp, k_b, k_x2 = jax.random.split(key, 5)

    w_depth = jax.random.normal(
        k_wd, (IN_CHANNELS, 1, KERNEL_SIZE), dtype=jnp.float32) * 0.5
    w_point = jax.random.normal(
        k_wp, (OUT_CHANNELS, IN_CHANNELS, 1), dtype=jnp.float32) * 0.5
    bias = (jax.random.normal(k_b, (OUT_CHANNELS,), dtype=jnp.float32) * 0.1
            if USE_BIAS else jnp.zeros((OUT_CHANNELS,), jnp.float32))

    # Lane-aligned case (L = 128) plus a ragged case exercising the N/L padding.
    for kx, (N, L) in ((k_x, (8, 128)), (k_x2, (3, 96))):
        x = jax.random.normal(kx, (N, IN_CHANNELS, L), dtype=jnp.float32)
        out = jax.block_until_ready(separable_conv1d(x, w_depth, w_point, bias))
        ref = _reference(x, w_depth, w_point, bias)
        assert out.shape == (N, OUT_CHANNELS, L), out.shape
        err = float(jnp.max(jnp.abs(out - ref)))
        assert jnp.allclose(out, ref, atol=1e-5, rtol=1e-5), err

    print("KERNEL_OK")
</pallas_src>

<mosaic_0001>
module attributes {stable_mosaic.version = 11 : i64} {
  func.func @_sepconv1d_kernel(%arg0: i32, %arg1: memref<4x3xf32, #tpu.memory_space<vmem>>, %arg2: memref<4x8x4xf32, #tpu.memory_space<vmem>>, %arg3: memref<8x1xf32, #tpu.memory_space<vmem>>, %arg4: memref<4x4x128xf32, #tpu.memory_space<vmem>>, %arg5: memref<4x8x128xf32, #tpu.memory_space<vmem>>) attributes {dimension_semantics = [#tpu.dimension_semantics<parallel>], iteration_bounds = array<i64: 2>, scalar_prefetch = 0 : i64, scratch_operands = 0 : i64, tpu.core_type = #tpu.core_type<tc>, window_params = [{pipeline_mode = #tpu.pipeline_mode<synchronous>, transform_indices = @transform_0, window_bounds = array<i64: 4, 3>}, {pipeline_mode = #tpu.pipeline_mode<synchronous>, transform_indices = @transform_1, window_bounds = array<i64: 4, 8, 4>}, {pipeline_mode = #tpu.pipeline_mode<synchronous>, transform_indices = @transform_2, window_bounds = array<i64: 8, 1>}, {transform_indices = @transform_3, window_bounds = array<i64: 4, 4, 128>}, {transform_indices = @transform_4, window_bounds = array<i64: 4, 8, 128>}]} {
    %c0 = arith.constant 0 : index
    %c0_0 = arith.constant 0 : index
    %c0_1 = arith.constant 0 : index
    %0 = vector.load %arg4[%c0, %c0_0, %c0_1] : memref<4x4x128xf32, #tpu.memory_space<vmem>>, vector<4x4x128xf32>
    %c0_2 = arith.constant 0 : index
    %c0_3 = arith.constant 0 : index
    %1 = vector.load %arg1[%c0_2, %c0_3] : memref<4x3xf32, #tpu.memory_space<vmem>>, vector<4x3xf32>
    %2 = tpu.iota {dimensions = array<i32: 2>} : vector<1x1x128xi32>
    %cst = arith.constant 0.000000e+00 : f32
    %3 = vector.broadcast %cst : f32 to vector<4x4x128xf32>
    %c1_i32 = arith.constant 1 : i32
    %4 = tpu.dynamic_rotate %0 by %c1_i32 dim 2 : vector<4x4x128xf32>, i32 -> vector<4x4x128xf32>
    %c1_i32_4 = arith.constant 1 : i32
    %5 = vector.broadcast %c1_i32_4 : i32 to vector<1x1x128xi32>
    %6 = arith.cmpi sge, %2, %5 : vector<1x1x128xi32>
    %cst_5 = arith.constant 0.000000e+00 : f32
    %7 = vector.shape_cast %6 : vector<1x1x128xi1> to vector<1x1x128xi1>
    %8 = vector.broadcast %7 : vector<1x1x128xi1> to vector<4x4x128xi1>
    %9 = vector.broadcast %cst_5 : f32 to vector<4x4x128xf32>
    %10 = arith.select %8, %4, %9 : vector<4x4x128xi1>, vector<4x4x128xf32>
    %11 = vector.extract_strided_slice %1 {offsets = [0, 0], sizes = [4, 1], strides = [1, 1]} : vector<4x3xf32> to vector<4x1xf32>
    %12 = vector.shape_cast %11 : vector<4x1xf32> to vector<1x4x1xf32>
    %13 = vector.broadcast %12 : vector<1x4x1xf32> to vector<4x4x128xf32>
    %14 = arith.mulf %10, %13 : vector<4x4x128xf32>
    %15 = arith.addf %3, %14 : vector<4x4x128xf32>
    %16 = vector.extract_strided_slice %1 {offsets = [0, 1], sizes = [4, 1], strides = [1, 1]} : vector<4x3xf32> to vector<4x1xf32>
    %17 = vector.shape_cast %16 : vector<4x1xf32> to vector<1x4x1xf32>
    %18 = vector.broadcast %17 : vector<1x4x1xf32> to vector<4x4x128xf32>
    %19 = arith.mulf %0, %18 : vector<4x4x128xf32>
    %20 = arith.addf %15, %19 : vector<4x4x128xf32>
    %c127_i32 = arith.constant 127 : i32
    %21 = tpu.dynamic_rotate %0 by %c127_i32 dim 2 : vector<4x4x128xf32>, i32 -> vector<4x4x128xf32>
    %c127_i32_6 = arith.constant 127 : i32
    %22 = vector.broadcast %c127_i32_6 : i32 to vector<1x1x128xi32>
    %23 = arith.cmpi slt, %2, %22 : vector<1x1x128xi32>
    %cst_7 = arith.constant 0.000000e+00 : f32
    %24 = vector.shape_cast %23 : vector<1x1x128xi1> to vector<1x1x128xi1>
    %25 = vector.broadcast %24 : vector<1x1x128xi1> to vector<4x4x128xi1>
    %26 = vector.broadcast %cst_7 : f32 to vector<4x4x128xf32>
    %27 = arith.select %25, %21, %26 : vector<4x4x128xi1>, vector<4x4x128xf32>
    %28 = vector.extract_strided_slice %1 {offsets = [0, 2], sizes = [4, 1], strides = [1, 1]} : vector<4x3xf32> to vector<4x1xf32>
    %29 = vector.shape_cast %28 : vector<4x1xf32> to vector<1x4x1xf32>
    %30 = vector.broadcast %29 : vector<1x4x1xf32> to vector<4x4x128xf32>
    %31 = arith.mulf %27, %30 : vector<4x4x128xf32>
    %32 = arith.addf %20, %31 : vector<4x4x128xf32>
    %c0_8 = arith.constant 0 : index
    %c0_9 = arith.constant 0 : index
    %c0_10 = arith.constant 0 : index
    %33 = vector.load %arg2[%c0_8, %c0_9, %c0_10] : memref<4x8x4xf32, #tpu.memory_space<vmem>>, vector<4x8x4xf32>
    "tpu.trace_start"() <{level = 10 : i32, message = "bof,bfl->bol"}> : () -> ()
    %cst_11 = arith.constant dense<0.000000e+00> : vector<4x8x128xf32>
    %34 = tpu.matmul %33, %32, %cst_11 {dimension_numbers = #tpu.dot_dimension_numbers<[2], [1], [1], [2], [0, 0, 0, 1, 1, 2], [0], [0]>} : vector<4x8x4xf32>, vector<4x4x128xf32>, vector<4x8x128xf32> -> vector<4x8x128xf32>
    "tpu.trace_stop"() : () -> ()
    %c0_12 = arith.constant 0 : index
    %c0_13 = arith.constant 0 : index
    %35 = vector.load %arg3[%c0_12, %c0_13] : memref<8x1xf32, #tpu.memory_space<vmem>>, vector<8x1xf32>
    %36 = vector.shape_cast %35 : vector<8x1xf32> to vector<1x8x1xf32>
    %37 = vector.broadcast %36 : vector<1x8x1xf32> to vector<4x8x128xf32>
    %38 = arith.addf %34, %37 : vector<4x8x128xf32>
    %c0_14 = arith.constant 0 : index
    %c0_15 = arith.constant 0 : index
    %c0_16 = arith.constant 0 : index
    %39 = vector.load %arg5[%c0_14, %c0_15, %c0_16] : memref<4x8x128xf32, #tpu.memory_space<vmem>>, vector<4x8x128xf32>
    tpu.vector_store %arg5[%c0_14, %c0_15, %c0_16], %38 {strides = array<i32>} : memref<4x8x128xf32, #tpu.memory_space<vmem>>, vector<4x8x128xf32>,
    return
  }
  func.func @transform_0(%arg0: i32) -> (i32, i32) {
    %c0_i32 = arith.constant 0 : i32
    %c0_i32_0 = arith.constant 0 : i32
    %c0_i32_1 = arith.constant 0 : i32
    return %c0_i32, %c0_i32_0 : i32, i32
  }
  func.func @transform_1(%arg0: i32) -> (i32, i32, i32) {
    %c0_i32 = arith.constant 0 : i32
    %c0_i32_0 = arith.constant 0 : i32
    %c0_i32_1 = arith.constant 0 : i32
    %c0_i32_2 = arith.constant 0 : i32
    return %c0_i32, %c0_i32_0, %c0_i32_1 : i32, i32, i32
  }
  func.func @transform_2(%arg0: i32) -> (i32, i32) {
    %c0_i32 = arith.constant 0 : i32
    %c0_i32_0 = arith.constant 0 : i32
    %c0_i32_1 = arith.constant 0 : i32
    return %c0_i32, %c0_i32_0 : i32, i32
  }
  func.func @transform_3(%arg0: i32) -> (i32, i32, i32) {
    %c0_i32 = arith.constant 0 : i32
    %c0_i32_0 = arith.constant 0 : i32
    %c0_i32_1 = arith.constant 0 : i32
    return %arg0, %c0_i32, %c0_i32_0 : i32, i32, i32
  }
  func.func @transform_4(%arg0: i32) -> (i32, i32, i32) {
    %c0_i32 = arith.constant 0 : i32
    %c0_i32_0 = arith.constant 0 : i32
    %c0_i32_1 = arith.constant 0 : i32
    return %arg0, %c0_i32, %c0_i32_0 : i32, i32, i32
  }
}

</mosaic_0001>

<llo_original>
// kernel: tpu_custom_call.1
$region0: #{tpu_custom_call.1}
  #allocation0 [shape = 'u32[]', space=smem, size = 0x4, offset = 0x4, fixed_abs, tag = 'smem constant byte address 0x4 - core index']
  #allocation1 [shape = 'u32[144,128]{1,0:T(1,128)}', space=vmem, size = 0x12000, scoped, tag = 'internal scratch']
  %s0 = inlined_call_operand.vmem [shape: f32[4,3], index: 0, kind: input, shape index: {}]
  %s1 = inlined_call_operand.vmem [shape: f32[4,8,4], index: 1, kind: input, shape index: {}]
  %s2 = inlined_call_operand.vmem [shape: f32[8,1], index: 2, kind: input, shape index: {}]
  %s3 = inlined_call_operand.vmem [shape: f32[8,4,128], index: 3, kind: input, shape index: {}]
  %s4 = inlined_call_operand.hbm [shape: f32[8,8,128], index: 4, kind: output, shape index: {}]
  %s5 = sld [smem:[#allocation0]]
  $region49: #{tpu_custom_call.1} parent=0
    _
  %s7 = ssub.s32 1, %s5
  %s8 = scalar_select 0, %s7, %s5
  $region1: #{tpu_custom_call.1} parent=0
    #allocation2 [shape = 'u8[32768]{0}', space=vmem, size = 0x8000, scoped, tag = 'output window, operand 0']
    #allocation3 [shape = 's32[2]{0}', space=sflag, size = 0x8, scoped, tag = 'scoped memory for tpu_custom_call.1']
    %9 = vsyncpa [#allocation3], 0
    %s10 = scalar_lea.sflag [#allocation3], 1
    %11 = vsyncpa %s10, 0
    loop: start=0, step=1, limit=4
    $region2: #{tpu_custom_call.1} parent=1 // loop_pre_header
      _
    $region3: #{tpu_custom_call.1} parent=1 // loop_header
      %s13 = sphi 0, %s17
      %p14 = scmp.ge.s32.totalorder %s13, 4
      %s21 = sphi 0, %s21
      %s23 = sphi 0, %s21
      %s24 = sphi 0, %s23
      %s38 = sphi 0, %s24
      %s42 = sphi 0, %s42
      %s44 = sphi 0, %s42
      %s45 = sphi 0, %s44
      %s59 = sphi 0, %s45
      %s63 = sphi 0, %s63
      %s65 = sphi 0, %s63
      %s66 = sphi 0, %s65
      %s80 = sphi 0, %s66
      %s86 = sphi 0, %s88
      %s89 = sphi 0, %s86
      %s90 = sphi 0, %s89
      %s106 = sphi 0, %s90
      %s112 = sphi 0, %s114
      %s115 = sphi 0, %s112
      %s116 = sphi 0, %s115
      %s132 = sphi 0, %s116
    $region4: #{tpu_custom_call.1} parent=1 // loop_header_branch
      %16 = sbr.rel (%p14) target = $region8
    $region5: #{tpu_custom_call.1} parent=1 // loop_body
      %s18 = ssub.s32 %s13, 1
      %s19 = ssub.s32 %s13, 2
      %s20 = sadd.s32 %s13, 1
      %s22 = sadd.s32 %s21, 1
      %p25 = scmp.eq.s32.totalorder %s13, 1
      %p26 = scmp.ne.s32.totalorder %s21, %s23
      %p27 = scmp.eq.s32.totalorder %s13, 0
      %p28 = por %p26, %p27
      %p29 = scmp.ne.s32.totalorder %s21, %s23
      %p30 = scmp.eq.s32.totalorder %s18, 1
      %p31 = por %p29, %p30
      %p32 = scmp.ne.s32.totalorder %s23, %s24
      %p33 = scmp.eq.s32.totalorder %s18, 0
      %p34 = por %p32, %p33
      %p35 = scmp.ne.s32.totalorder %s23, %s24
      %p36 = scmp.eq.s32.totalorder %s19, 1
      %p37 = por %p35, %p36
      %p39 = scmp.ne.s32.totalorder %s24, %s38
      %p40 = scmp.eq.s32.totalorder %s19, 0
      %p41 = por %p39, %p40
      %s43 = sadd.s32 %s42, 1
      %p46 = scmp.eq.s32.totalorder %s13, 1
      %p47 = scmp.ne.s32.totalorder %s42, %s44
      %p48 = scmp.eq.s32.totalorder %s13, 0
      %p49 = por %p47, %p48
      %p50 = scmp.ne.s32.totalorder %s42, %s44
      %p51 = scmp.eq.s32.totalorder %s18, 1
      %p52 = por %p50, %p51
      %p53 = scmp.ne.s32.totalorder %s44, %s45
      %p54 = scmp.eq.s32.totalorder %s18, 0
      %p55 = por %p53, %p54
      %p56 = scmp.ne.s32.totalorder %s44, %s45
      %p57 = scmp.eq.s32.totalorder %s19, 1
      %p58 = por %p56, %p57
      %p60 = scmp.ne.s32.totalorder %s45, %s59
      %p61 = scmp.eq.s32.totalorder %s19, 0
      %p62 = por %p60, %p61
      %s64 = sadd.s32 %s63, 1
      %p67 = scmp.eq.s32.totalorder %s13, 1
      %p68 = scmp.ne.s32.totalorder %s63, %s65
      %p69 = scmp.eq.s32.totalorder %s13, 0
      %p70 = por %p68, %p69
      %p71 = scmp.ne.s32.totalorder %s63, %s65
      %p72 = scmp.eq.s32.totalorder %s18, 1
      %p73 = por %p71, %p72
      %p74 = scmp.ne.s32.totalorder %s65, %s66
      %p75 = scmp.eq.s32.totalorder %s18, 0
      %p76 = por %p74, %p75
      %p77 = scmp.ne.s32.totalorder %s65, %s66
      %p78 = scmp.eq.s32.totalorder %s19, 1
      %p79 = por %p77, %p78
      %p81 = scmp.ne.s32.totalorder %s66, %s80
      %p82 = scmp.eq.s32.totalorder %s19, 0
      %p83 = por %p81, %p82
      %s84 = ssub.s32 %s13, %s20
      %p85 = scmp.eq.s32.totalorder %s84, 0
      %s87 = sadd.s32 %s86, 1
      %s88 = scalar_select %p85, %s86, %s87
      %p91 = pneg %p85
      %p92 = scmp.eq.s32.totalorder %s13, 1
      %p93 = por %p91, %p92
      %p94 = scmp.ne.s32.totalorder %s86, %s89
      %p95 = scmp.eq.s32.totalorder %s13, 0
      %p96 = por %p94, %p95
      %p97 = scmp.ne.s32.totalorder %s86, %s89
      %p98 = scmp.eq.s32.totalorder %s18, 1
      %p99 = por %p97, %p98
      %p100 = scmp.ne.s32.totalorder %s89, %s90
      %p101 = scmp.eq.s32.totalorder %s18, 0
      %p102 = por %p100, %p101
      %p103 = scmp.ne.s32.totalorder %s89, %s90
      %p104 = scmp.eq.s32.totalorder %s19, 1
      %p105 = por %p103, %p104
      %p107 = scmp.ne.s32.totalorder %s90, %s106
      %p108 = scmp.eq.s32.totalorder %s19, 0
      %p109 = por %p107, %p108
      %s110 = ssub.s32 %s13, %s20
      %p111 = scmp.eq.s32.totalorder %s110, 0
      %s113 = sadd.s32 %s112, 1
      %s114 = scalar_select %p111, %s112, %s113
      %p117 = pneg %p111
      %p118 = scmp.eq.s32.totalorder %s13, 1
      %p119 = por %p117, %p118
      %p120 = scmp.ne.s32.totalorder %s112, %s115
      %p121 = scmp.eq.s32.totalorder %s13, 0
      %p122 = por %p120, %p121
      %p123 = scmp.ne.s32.totalorder %s112, %s115
      %p124 = scmp.eq.s32.totalorder %s18, 1
      %p125 = por %p123, %p124
      %p126 = scmp.ne.s32.totalorder %s115, %s116
      %p127 = scmp.eq.s32.totalorder %s18, 0
      %p128 = por %p126, %p127
      %p129 = scmp.ne.s32.totalorder %s115, %s116
      %p130 = scmp.eq.s32.totalorder %s19, 1
      %p131 = por %p129, %p130
      %p133 = scmp.ne.s32.totalorder %s116, %s132
      %p134 = scmp.eq.s32.totalorder %s19, 0
      %p135 = por %p133, %p134
      %p136 = scmp.le.s32.totalorder 1, %s13
      %p137 = scmp.lt.s32.totalorder %s13, 3
      %p138 = pnand %p136, %p137
      %p139 = pneg %p138
      // Predicated region
      $region9: #{tpu_custom_call.1} parent=5 // pred_check
        _
      $region10: #{tpu_custom_call.1} parent=5 // pred_check_branch
        %141 = sbr.rel (%p138) target = $region12
      $region11: #{tpu_custom_call.1} parent=5 // pred_region
        %s142 = ssub.s32 %s13, 1
        // Predicated region
        $region13: #{tpu_custom_call.1} parent=11 // pred_check
          %p143 = pneg %p34
        $region14: #{tpu_custom_call.1} parent=11 // pred_check_branch
          %145 = sbr.rel (%p143) target = $region16
        $region15: #{tpu_custom_call.1} parent=11 // pred_region
          _
        $region16: #{tpu_custom_call.1} parent=11 // pred_fallthru
          _
        // Predicated region
        $region17: #{tpu_custom_call.1} parent=11 // pred_check
          %p146 = pneg %p55
        $region18: #{tpu_custom_call.1} parent=11 // pred_check_branch
          %148 = sbr.rel (%p146) target = $region20
        $region19: #{tpu_custom_call.1} parent=11 // pred_region
          _
        $region20: #{tpu_custom_call.1} parent=11 // pred_fallthru
          _
        // Predicated region
        $region21: #{tpu_custom_call.1} parent=11 // pred_check
          %p149 = pneg %p76
        $region22: #{tpu_custom_call.1} parent=11 // pred_check_branch
          %151 = sbr.rel (%p149) target = $region24
        $region23: #{tpu_custom_call.1} parent=11 // pred_region
          _
        $region24: #{tpu_custom_call.1} parent=11 // pred_fallthru
          _
      $region12: #{tpu_custom_call.1} parent=5 // pred_fallthru
        _
      %p152 = scmp.lt.s32.totalorder %s13, 2
      // Predicated region
      $region25: #{tpu_custom_call.1} parent=5 // pred_check
        %p153 = pneg %p152
      $region26: #{tpu_custom_call.1} parent=5 // pred_check_branch
        %155 = sbr.rel (%p153) target = $region28
      $region27: #{tpu_custom_call.1} parent=5 // pred_region
        // Predicated region
        $region29: #{tpu_custom_call.1} parent=27 // pred_check
          %p156 = pneg %p96
        $region30: #{tpu_custom_call.1} parent=27 // pred_check_branch
          %158 = sbr.rel (%p156) target = $region32
        $region31: #{tpu_custom_call.1} parent=27 // pred_region
          %s159 = smul.u32 4, %s13
          %p160 = scmp.lt.s32.totalorder %s159, 7
          %s161 = scalar_select %p160, %s159, 7
          %s162 = smul.addr %s161, 4
          %s163 = scalar_lea.vmem %s3, %s162
          %s164 = smul.u32 4, %s13
        $region32: #{tpu_custom_call.1} parent=27 // pred_fallthru
          _
      $region28: #{tpu_custom_call.1} parent=5 // pred_fallthru
        _
      %p165 = scmp.le.s32.totalorder 1, %s13
      %p166 = scmp.lt.s32.totalorder %s13, 3
      %p167 = pnand %p165, %p166
      %p168 = pneg %p167
      // Predicated region
      $region33: #{tpu_custom_call.1} parent=5 // pred_check
        _
      $region34: #{tpu_custom_call.1} parent=5 // pred_check_branch
        %170 = sbr.rel (%p167) target = $region36
      $region35: #{tpu_custom_call.1} parent=5 // pred_region
        %s171 = ssub.s32 %s13, 1
        %p172 = pneg %p34
        %p173 = pneg %p31
        %p174 = pneg %p55
        %p175 = pneg %p52
        %p176 = pneg %p76
        %p177 = pneg %p73
        %s178 = smul.u32 4, %s18
        %p179 = scmp.lt.s32.totalorder %s178, 7
        %s180 = scalar_select %p179, %s178, 7
        %s181 = smul.addr %s180, 4
        %s182 = scalar_lea.vmem %s3, %s181
        %p183 = pneg %p102
        %p184 = pneg %p99
        %p185 = pneg %p128
        %p186 = pneg %p125
        %s187 = sand.u32 %s115, 1
        %s188 = scalar_lea.sflag [#allocation3], %s187
        %s189 = sand.u32 %s115, 1
        %s190 = smul.addr %s189, 32
        %s191 = scalar_lea.vmem [#allocation2], %s190
        %s192 = smul.u32 4, %s18
        %p193 = scmp.lt.s32.totalorder %s192, 7
        %s194 = scalar_select %p193, %s192, 7
        %s195 = smul.addr %s194, 4
        %s196 = scalar_lea.vmem %s3, %s195
        %s197 = smul.u32 4, %s18
        %s198 = smul.u32 4, %s18
        %v199 = vld [vmem:[%s196] sm:$0xf]
        %v200 = vld [vmem:[%s196 + $0x4] sm:$0xf]
        %v201 = vld [vmem:[%s196 + $0x8] sm:$0xf]
        %v202 = vld [vmem:[%s196 + $0xc] sm:$0xf]
        %v203 = vld [vmem:[%s0] sm:$0xf]
        %v204 = vlaneseq
        %v205 = vand.u32 %v204, 127
        %206 = vrot.lane.b32.xlu0 %v199, 1
        %v207 = vpop.permute.xlu0 %206
        %208 = vrot.lane.b32.xlu0 %v200, 1
        %v209 = vpop.permute.xlu0 %208
        %210 = vrot.lane.b32.xlu0 %v201, 1
        %v211 = vpop.permute.xlu0 %210
        %212 = vrot.lane.b32.xlu0 %v202, 1
        %v213 = vpop.permute.xlu0 %212
        %vm214 = vcmp.ge.s32.totalorder %v205, 1
        %v215 = vsel %vm214, 1, 0
        %vm216 = vcmp.eq.s32.totalorder %v215, 1
        %v217 = vsel %vm216, %v207, 0.0
        %v218 = vsel %vm216, %v209, 0.0
        %v219 = vsel %vm216, %v211, 0.0
        %v220 = vsel %vm216, %v213, 0.0
        %222 = vset.pattern.permute.xlu0 0
        %223 = vperm.xlu0 %222, %v203
        %v224 = vpop.permute.xlu0 %223
        %v226 = vmul.f32 %v217, %v224
        %v227 = vmul.f32 %v218, %v224
        %v228 = vmul.f32 %v219, %v224
        %v229 = vmul.f32 %v220, %v224
        %v230 = vadd.f32 %v226, 0.0
        %v231 = vadd.f32 %v227, 0.0
        %v232 = vadd.f32 %v228, 0.0
        %v233 = vadd.f32 %v229, 0.0
        %234 = vset.pattern.permute.xlu0 1
        %235 = vperm.xlu0 %234, %v203
        %v236 = vpop.permute.xlu0 %235
        %v238 = vmul.f32 %v199, %v236
        %v239 = vmul.f32 %v200, %v236
        %v240 = vmul.f32 %v201, %v236
        %v241 = vmul.f32 %v202, %v236
        %v242 = vadd.f32 %v230, %v238
        %v243 = vadd.f32 %v231, %v239
        %v244 = vadd.f32 %v232, %v240
        %v245 = vadd.f32 %v233, %v241
        %246 = vrot.lane.b32.xlu0 %v199, 127
        %v247 = vpop.permute.xlu0 %246
        %248 = vrot.lane.b32.xlu0 %v200, 127
        %v249 = vpop.permute.xlu0 %248
        %250 = vrot.lane.b32.xlu0 %v201, 127
        %v251 = vpop.permute.xlu0 %250
        %252 = vrot.lane.b32.xlu0 %v202, 127
        %v253 = vpop.permute.xlu0 %252
        %vm254 = vcmp.lt.s32.totalorder %v205, 127
        %v255 = vsel %vm254, 1, 0
        %vm256 = vcmp.eq.s32.totalorder %v255, 1
        %v257 = vsel %vm256, %v247, 0.0
        %v258 = vsel %vm256, %v249, 0.0
        %v259 = vsel %vm256, %v251, 0.0
        %v260 = vsel %vm256, %v253, 0.0
        %261 = vset.pattern.permute.xlu0 2
        %262 = vperm.xlu0 %261, %v203
        %v263 = vpop.permute.xlu0 %262
        %v265 = vmul.f32 %v257, %v263
        %v266 = vmul.f32 %v258, %v263
        %v267 = vmul.f32 %v259, %v263
        %v268 = vmul.f32 %v260, %v263
        %v269 = vadd.f32 %v242, %v265
        %v270 = vadd.f32 %v243, %v266
        %v271 = vadd.f32 %v244, %v267
        %v272 = vadd.f32 %v245, %v268
        %v273 = vld [vmem:[%s1] sm:$0xff]
        %v274 = vld [vmem:[%s1 + $0x8] sm:$0xff]
        %v275 = vld [vmem:[%s1 + $0x10] sm:$0xff]
        %v276 = vld [vmem:[%s1 + $0x18] sm:$0xff]
        %v277 = vld [vmem:[%s2] sm:$0xff]
        %279 = vset.pattern.permute.xlu0 0
        %280 = vperm.xlu0 %279, %v277
        %v281 = vpop.permute.xlu0 %280
        %vm283 = vcmask 31744
        %v285 = vsel %vm283, %v273, 0
        %vm287 = vcmask 1043456
        %v289 = vsel %vm287, %v269, 0
        %291 = vmatprep.subr.mxu0 0.0
        %292 = vmatpush1.msra.mxu0 %v289
        %293 = vmatprep.subr.mxu0 0.0
        %294 = vmatpush1.msra.mxu0 0.0
        %295 = vmatprep.subr.mxu0 0.0
        %296 = vmatpush1.msra.mxu0 0.0
        %297 = vmatprep.subr.mxu0 0.0
        %298 = vmatpush1.msra.mxu0 0.0
        %299 = vmatprep.subr.mxu0 0.0
        %300 = vmatpush1.msra.mxu0 0.0
        %301 = vmatprep.subr.mxu0 0.0
        %302 = vmatpush1.msra.mxu0 0.0
        %303 = vmatprep.subr.mxu0 0.0
        %304 = vmatpush1.msra.mxu0 0.0
        %305 = vmatprep.subr.mxu0 0.0
        %306 = vmatpush1.msra.mxu0 0.0
        %307 = vmatprep.subr.mxu0 0.0
        %308 = vmatpush1.msra.mxu0 0.0
        %309 = vmatprep.subr.mxu0 0.0
        %310 = vmatpush1.msra.mxu0 0.0
        %311 = vmatprep.subr.mxu0 0.0
        %312 = vmatpush1.msra.mxu0 0.0
        %313 = vmatprep.subr.mxu0 0.0
        %314 = vmatpush1.msra.mxu0 0.0
        %315 = vmatprep.subr.mxu0 0.0
        %316 = vmatpush1.msra.mxu0 0.0
        %317 = vmatprep.subr.mxu0 0.0
        %318 = vmatpush1.msra.mxu0 0.0
        %319 = vmatprep.subr.mxu0 0.0
        %320 = vmatpush1.msra.mxu0 0.0
        %321 = vmatprep.subr.mxu0 0.0
        %322 = vmatpush1.msra.mxu0 0.0
        %323 = vmatprep.subr.mxu0 0.0
        %324 = vmatpush1.msra.mxu0 0.0
        %325 = vmatprep.subr.mxu0 0.0
        %326 = vmatpush1.msra.mxu0 0.0
        %327 = vmatprep.subr.mxu0 0.0
        %328 = vmatpush1.msra.mxu0 0.0
        %329 = vmatprep.subr.mxu0 0.0
        %330 = vmatpush1.msra.mxu0 0.0
        %331 = vmatprep.subr.mxu0 0.0
        %332 = vmatpush1.msra.mxu0 0.0
        %333 = vmatprep.subr.mxu0 0.0
        %334 = vmatpush1.msra.mxu0 0.0
        %335 = vmatprep.subr.mxu0 0.0
        %336 = vmatpush1.msra.mxu0 0.0
        %337 = vmatprep.subr.mxu0 0.0
        %338 = vmatpush1.msra.mxu0 0.0
        %339 = vmatprep.subr.mxu0 0.0
        %340 = vmatpush1.msra.mxu0 0.0
        %341 = vmatprep.subr.mxu0 0.0
        %342 = vmatpush1.msra.mxu0 0.0
        %343 = vmatprep.subr.mxu0 0.0
        %344 = vmatpush1.msra.mxu0 0.0
        %345 = vmatprep.subr.mxu0 0.0
        %346 = vmatpush1.msra.mxu0 0.0
        %347 = vmatprep.subr.mxu0 0.0
        %348 = vmatpush1.msra.mxu0 0.0
        %349 = vmatprep.subr.mxu0 0.0
        %350 = vmatpush1.msra.mxu0 0.0
        %351 = vmatprep.subr.mxu0 0.0
        %352 = vmatpush1.msra.mxu0 0.0
        %353 = vmatprep.subr.mxu0 0.0
        %354 = vmatpush1.msra.mxu0 0.0
        %355 = vmatprep.mubr.f32.mxu0 0.0
        %356 = vmatmul.mubr.f32.gmra.mrb[0].mxu0 %v285
        %v357 = vpop.f32.mrb[0].mxu0
        %v358 = vadd.f32 %v281, %v357
        %v359 = vpop.f32.mrb[0].mxu0
        %360 = vdwg.mxu0
        %v362 = vsel %vm283, %v274, 0
        %v365 = vsel %vm287, %v270, 0
        %367 = vmatprep.subr.mxu0 0.0
        %368 = vmatpush1.msra.mxu0 %v365
        %369 = vmatprep.subr.mxu0 0.0
        %370 = vmatpush1.msra.mxu0 0.0
        %371 = vmatprep.subr.mxu0 0.0
        %372 = vmatpush1.msra.mxu0 0.0
        %373 = vmatprep.subr.mxu0 0.0
        %374 = vmatpush1.msra.mxu0 0.0
        %375 = vmatprep.subr.mxu0 0.0
        %376 = vmatpush1.msra.mxu0 0.0
        %377 = vmatprep.subr.mxu0 0.0
        %378 = vmatpush1.msra.mxu0 0.0
        %379 = vmatprep.subr.mxu0 0.0
        %380 = vmatpush1.msra.mxu0 0.0
        %381 = vmatprep.subr.mxu0 0.0
        %382 = vmatpush1.msra.mxu0 0.0
        %383 = vmatprep.subr.mxu0 0.0
        %384 = vmatpush1.msra.mxu0 0.0
        %385 = vmatprep.subr.mxu0 0.0
        %386 = vmatpush1.msra.mxu0 0.0
        %387 = vmatprep.subr.mxu0 0.0
        %388 = vmatpush1.msra.mxu0 0.0
        %389 = vmatprep.subr.mxu0 0.0
        %390 = vmatpush1.msra.mxu0 0.0
        %391 = vmatprep.subr.mxu0 0.0
        %392 = vmatpush1.msra.mxu0 0.0
        %393 = vmatprep.subr.mxu0 0.0
        %394 = vmatpush1.msra.mxu0 0.0
        %395 = vmatprep.subr.mxu0 0.0
        %396 = vmatpush1.msra.mxu0 0.0
        %397 = vmatprep.subr.mxu0 0.0
        %398 = vmatpush1.msra.mxu0 0.0
        %399 = vmatprep.subr.mxu0 0.0
        %400 = vmatpush1.msra.mxu0 0.0
        %401 = vmatprep.subr.mxu0 0.0
        %402 = vmatpush1.msra.mxu0 0.0
        %403 = vmatprep.subr.mxu0 0.0
        %404 = vmatpush1.msra.mxu0 0.0
        %405 = vmatprep.subr.mxu0 0.0
        %406 = vmatpush1.msra.mxu0 0.0
        %407 = vmatprep.subr.mxu0 0.0
        %408 = vmatpush1.msra.mxu0 0.0
        %409 = vmatprep.subr.mxu0 0.0
        %410 = vmatpush1.msra.mxu0 0.0
        %411 = vmatprep.subr.mxu0 0.0
        %412 = vmatpush1.msra.mxu0 0.0
        %413 = vmatprep.subr.mxu0 0.0
        %414 = vmatpush1.msra.mxu0 0.0
        %415 = vmatprep.subr.mxu0 0.0
        %416 = vmatpush1.msra.mxu0 0.0
        %417 = vmatprep.subr.mxu0 0.0
        %418 = vmatpush1.msra.mxu0 0.0
        %419 = vmatprep.subr.mxu0 0.0
        %420 = vmatpush1.msra.mxu0 0.0
        %421 = vmatprep.subr.mxu0 0.0
        %422 = vmatpush1.msra.mxu0 0.0
        %423 = vmatprep.subr.mxu0 0.0
        %424 = vmatpush1.msra.mxu0 0.0
        %425 = vmatprep.subr.mxu0 0.0
        %426 = vmatpush1.msra.mxu0 0.0
        %427 = vmatprep.subr.mxu0 0.0
        %428 = vmatpush1.msra.mxu0 0.0
        %429 = vmatprep.subr.mxu0 0.0
        %430 = vmatpush1.msra.mxu0 0.0
        %431 = vmatprep.mubr.f32.mxu0 0.0
        %432 = vmatmul.mubr.f32.gmra.mrb[0].mxu0 %v362
        %v433 = vpop.f32.mrb[0].mxu0
        %v434 = vadd.f32 %v281, %v433
        %v435 = vpop.f32.mrb[0].mxu0
        %436 = vdwg.mxu0
        %v438 = vsel %vm283, %v275, 0
        %v441 = vsel %vm287, %v271, 0
        %443 = vmatprep.subr.mxu0 0.0
        %444 = vmatpush1.msra.mxu0 %v441
        %445 = vmatprep.subr.mxu0 0.0
        %446 = vmatpush1.msra.mxu0 0.0
        %447 = vmatprep.subr.mxu0 0.0
        %448 = vmatpush1.msra.mxu0 0.0
        %449 = vmatprep.subr.mxu0 0.0
        %450 = vmatpush1.msra.mxu0 0.0
        %451 = vmatprep.subr.mxu0 0.0
        %452 = vmatpush1.msra.mxu0 0.0
        %453 = vmatprep.subr.mxu0 0.0
        %454 = vmatpush1.msra.mxu0 0.0
        %455 = vmatprep.subr.mxu0 0.0
        %456 = vmatpush1.msra.mxu0 0.0
        %457 = vmatprep.subr.mxu0 0.0
        %458 = vmatpush1.msra.mxu0 0.0
        %459 = vmatprep.subr.mxu0 0.0
        %460 = vmatpush1.msra.mxu0 0.0
        %461 = vmatprep.subr.mxu0 0.0
        %462 = vmatpush1.msra.mxu0 0.0
        %463 = vmatprep.subr.mxu0 0.0
        %464 = vmatpush1.msra.mxu0 0.0
        %465 = vmatprep.subr.mxu0 0.0
        %466 = vmatpush1.msra.mxu0 0.0
        %467 = vmatprep.subr.mxu0 0.0
        %468 = vmatpush1.msra.mxu0 0.0
        %469 = vmatprep.subr.mxu0 0.0
        %470 = vmatpush1.msra.mxu0 0.0
        %471 = vmatprep.subr.mxu0 0.0
        %472 = vmatpush1.msra.mxu0 0.0
        %473 = vmatprep.subr.mxu0 0.0
        %474 = vmatpush1.msra.mxu0 0.0
        %475 = vmatprep.subr.mxu0 0.0
        %476 = vmatpush1.msra.mxu0 0.0
        %477 = vmatprep.subr.mxu0 0.0
        %478 = vmatpush1.msra.mxu0 0.0
        %479 = vmatprep.subr.mxu0 0.0
        %480 = vmatpush1.msra.mxu0 0.0
        %481 = vmatprep.subr.mxu0 0.0
        %482 = vmatpush1.msra.mxu0 0.0
        %483 = vmatprep.subr.mxu0 0.0
        %484 = vmatpush1.msra.mxu0 0.0
        %485 = vmatprep.subr.mxu0 0.0
        %486 = vmatpush1.msra.mxu0 0.0
        %487 = vmatprep.subr.mxu0 0.0
        %488 = vmatpush1.msra.mxu0 0.0
        %489 = vmatprep.subr.mxu0 0.0
        %490 = vmatpush1.msra.mxu0 0.0
        %491 = vmatprep.subr.mxu0 0.0
        %492 = vmatpush1.msra.mxu0 0.0
        %493 = vmatprep.subr.mxu0 0.0
        %494 = vmatpush1.msra.mxu0 0.0
        %495 = vmatprep.subr.mxu0 0.0
        %496 = vmatpush1.msra.mxu0 0.0
        %497 = vmatprep.subr.mxu0 0.0
        %498 = vmatpush1.msra.mxu0 0.0
        %499 = vmatprep.subr.mxu0 0.0
        %500 = vmatpush1.msra.mxu0 0.0
        %501 = vmatprep.subr.mxu0 0.0
        %502 = vmatpush1.msra.mxu0 0.0
        %503 = vmatprep.subr.mxu0 0.0
        %504 = vmatpush1.msra.mxu0 0.0
        %505 = vmatprep.subr.mxu0 0.0
        %506 = vmatpush1.msra.mxu0 0.0
        %507 = vmatprep.mubr.f32.mxu0 0.0
        %508 = vmatmul.mubr.f32.gmra.mrb[0].mxu0 %v438
        %v509 = vpop.f32.mrb[0].mxu0
        %v510 = vadd.f32 %v281, %v509
        %v511 = vpop.f32.mrb[0].mxu0
        %512 = vdwg.mxu0
        %v514 = vsel %vm283, %v276, 0
        %v517 = vsel %vm287, %v272, 0
        %519 = vmatprep.subr.mxu0 0.0
        %520 = vmatpush1.msra.mxu0 %v517
        %521 = vmatprep.subr.mxu0 0.0
        %522 = vmatpush1.msra.mxu0 0.0
        %523 = vmatprep.subr.mxu0 0.0
        %524 = vmatpush1.msra.mxu0 0.0
        %525 = vmatprep.subr.mxu0 0.0
        %526 = vmatpush1.msra.mxu0 0.0
        %527 = vmatprep.subr.mxu0 0.0
        %528 = vmatpush1.msra.mxu0 0.0
        %529 = vmatprep.subr.mxu0 0.0
        %530 = vmatpush1.msra.mxu0 0.0
        %531 = vmatprep.subr.mxu0 0.0
        %532 = vmatpush1.msra.mxu0 0.0
        %533 = vmatprep.subr.mxu0 0.0
        %534 = vmatpush1.msra.mxu0 0.0
        %535 = vmatprep.subr.mxu0 0.0
        %536 = vmatpush1.msra.mxu0 0.0
        %537 = vmatprep.subr.mxu0 0.0
        %538 = vmatpush1.msra.mxu0 0.0
        %539 = vmatprep.subr.mxu0 0.0
        %540 = vmatpush1.msra.mxu0 0.0
        %541 = vmatprep.subr.mxu0 0.0
        %542 = vmatpush1.msra.mxu0 0.0
        %543 = vmatprep.subr.mxu0 0.0
        %544 = vmatpush1.msra.mxu0 0.0
        %545 = vmatprep.subr.mxu0 0.0
        %546 = vmatpush1.msra.mxu0 0.0
        %547 = vmatprep.subr.mxu0 0.0
        %548 = vmatpush1.msra.mxu0 0.0
        %549 = vmatprep.subr.mxu0 0.0
        %550 = vmatpush1.msra.mxu0 0.0
        %551 = vmatprep.subr.mxu0 0.0
        %552 = vmatpush1.msra.mxu0 0.0
        %553 = vmatprep.subr.mxu0 0.0
        %554 = vmatpush1.msra.mxu0 0.0
        %555 = vmatprep.subr.mxu0 0.0
        %556 = vmatpush1.msra.mxu0 0.0
        %557 = vmatprep.subr.mxu0 0.0
        %558 = vmatpush1.msra.mxu0 0.0
        %559 = vmatprep.subr.mxu0 0.0
        %560 = vmatpush1.msra.mxu0 0.0
        %561 = vmatprep.subr.mxu0 0.0
        %562 = vmatpush1.msra.mxu0 0.0
        %563 = vmatprep.subr.mxu0 0.0
        %564 = vmatpush1.msra.mxu0 0.0
        %565 = vmatprep.subr.mxu0 0.0
        %566 = vmatpush1.msra.mxu0 0.0
        %567 = vmatprep.subr.mxu0 0.0
        %568 = vmatpush1.msra.mxu0 0.0
        %569 = vmatprep.subr.mxu0 0.0
        %570 = vmatpush1.msra.mxu0 0.0
        %571 = vmatprep.subr.mxu0 0.0
        %572 = vmatpush1.msra.mxu0 0.0
        %573 = vmatprep.subr.mxu0 0.0
        %574 = vmatpush1.msra.mxu0 0.0
        %575 = vmatprep.subr.mxu0 0.0
        %576 = vmatpush1.msra.mxu0 0.0
        %577 = vmatprep.subr.mxu0 0.0
        %578 = vmatpush1.msra.mxu0 0.0
        %579 = vmatprep.subr.mxu0 0.0
        %580 = vmatpush1.msra.mxu0 0.0
        %581 = vmatprep.subr.mxu0 0.0
        %582 = vmatpush1.msra.mxu0 0.0
        %583 = vmatprep.mubr.f32.mxu0 0.0
        %584 = vmatmul.mubr.f32.gmra.mrb[0].mxu0 %v514
        %v585 = vpop.f32.mrb[0].mxu0
        %v586 = vadd.f32 %v281, %v585
        %v587 = vpop.f32.mrb[0].mxu0
        %588 = vdwg.mxu0
        %589 = vst [vmem:[%s191] sm:$0xff] %v358
        %590 = vst [vmem:[%s191 + $0x8] sm:$0xff] %v434
        %591 = vst [vmem:[%s191 + $0x10] sm:$0xff] %v510
        %592 = vst [vmem:[%s191 + $0x18] sm:$0xff] %v586
        %s593 = sand.u32 %s115, 1
        %s594 = scalar_lea.sflag [#allocation3], %s593
        %s595 = sand.u32 %s115, 1
        %s596 = smul.addr %s595, 32
        %s597 = scalar_lea.vmem [#allocation2], %s596
        // Predicated region
        $region37: #{tpu_custom_call.1} parent=35 // pred_check
          %p598 = pneg %p125
        $region38: #{tpu_custom_call.1} parent=35 // pred_check_branch
          %600 = sbr.rel (%p598) target = $region40
        $region39: #{tpu_custom_call.1} parent=35 // pred_region
          %s601 = smul.u32 4, %s18
          %s603 = ssub.s32 512, 512
          %604 = vsyncadd %s594, %s603
          %s605 = smul.addr %s601, 128
          %s606 = scalar_lea.hbm %s4, %s605
          %s607 = sshll.u32 %s597, 4
          %s608 = int_to_ptr.vmem [resolvable:$true] %s607
          %613 = dma.vmem_to_hbm [thread:$0]  %s608, 512, %s606, %s594, 128, 128, 8
        $region40: #{tpu_custom_call.1} parent=35 // pred_fallthru
          _
      $region36: #{tpu_custom_call.1} parent=5 // pred_fallthru
        _
      %p614 = scmp.le.s32.totalorder 2, %s13
      // Predicated region
      $region41: #{tpu_custom_call.1} parent=5 // pred_check
        %p615 = pneg %p614
      $region42: #{tpu_custom_call.1} parent=5 // pred_check_branch
        %617 = sbr.rel (%p615) target = $region44
      $region43: #{tpu_custom_call.1} parent=5 // pred_region
        %s618 = ssub.s32 %s13, 2
        // Predicated region
        $region45: #{tpu_custom_call.1} parent=43 // pred_check
          %p619 = pneg %p131
        $region46: #{tpu_custom_call.1} parent=43 // pred_check_branch
          %621 = sbr.rel (%p619) target = $region48
        $region47: #{tpu_custom_call.1} parent=43 // pred_region
          %s622 = sand.u32 %s116, 1
          %s623 = scalar_lea.sflag [#allocation3], %s622
          %s624 = sand.u32 %s116, 1
          %s625 = smul.addr %s624, 32
          %s626 = scalar_lea.vmem [#allocation2], %s625
          %627 = dma.done %s623, 512
        $region48: #{tpu_custom_call.1} parent=43 // pred_fallthru
          _
      $region44: #{tpu_custom_call.1} parent=5 // pred_fallthru
        _
    $region6: #{tpu_custom_call.1} parent=1 // loop_footer
      %s17 = sadd.s32 1, %s13
    $region7: #{tpu_custom_call.1} parent=1 // loop_footer_branch
      %12 = sbr.rel target = $region3
    $region8: #{tpu_custom_call.1} parent=1 // loop_exit
      _
    %628 = vsyncpa [#allocation3], 1
    %s629 = scalar_lea.sflag [#allocation3], 1
    %630 = vsyncpa %s629, 1

</llo_original>
